<compile_context>
chip_gen: v7x
topology: tpu7x:2x2x1
jax: 0.10.0
libtpu: 0.0.40
codegen_flags: <defaults>
</compile_context>

<pallas_src>
import math
import numpy as np
import jax
import jax.numpy as jnp
from jax.experimental import pallas as pl
from jax.experimental.pallas import tpu as pltpu

# ------------------------- config (training_params) -------------------------
N_BLOCK = 2
ENCODER_LAYER_DIMS = [32, 16, 8]   # [input_dim, L1, L2]; decondenser kernel_size = 8
ENCODER_CHANNELS = [8, 16]         # encoder_channels[-1] = decondenser out channels
Z_DIM = 4                          # bottleneck_dim
KS = (1, 3, 5)                     # kernels k1, k2, k3 (odd -> length preserving)
BN_EPS = 1e-5


def build_cfgs():
    cfgs = []
    L_in = ENCODER_LAYER_DIMS[-1]
    for i_block in range(N_BLOCK):
        L_out = ENCODER_LAYER_DIMS[N_BLOCK - i_block - 1]
        in_ch = ENCODER_CHANNELS[N_BLOCK - i_block - 1]
        out_ch = 1 if i_block == N_BLOCK - 1 else in_ch // 2
        cfgs.append(dict(ks=KS, in_ch=in_ch, out_ch=out_ch, L_in=L_in, L_out=L_out))
        L_in = L_out
    return cfgs


def upsample_matrix(L_in, L_out):
    """Interpolation matrix of torch.nn.Upsample(mode='linear', align_corners=True)."""
    U = np.zeros((L_out, L_in), np.float32)
    if L_out == 1 or L_in == 1:
        U[:, 0] = 1.0
    else:
        for t in range(L_out):
            src = t * (L_in - 1) / (L_out - 1)
            l = min(int(np.floor(src)), L_in - 2)
            w = src - l
            U[t, l] += 1.0 - w
            U[t, l + 1] += w
    return U


# ----------------------------- parameter init --------------------------------
def init_params(key, cfgs):
    keys = iter(jax.random.split(key, 64))
    C_dec = ENCODER_CHANNELS[-1]
    K_dec = ENCODER_LAYER_DIMS[-1]
    s = 1.0 / math.sqrt(Z_DIM * K_dec)
    Wd = jax.random.uniform(next(keys), (Z_DIM, C_dec, K_dec), jnp.float32, -s, s)
    bd = jax.random.uniform(next(keys), (C_dec,), jnp.float32, -s, s)
    blocks = []
    for cfg in cfgs:
        in_ch, out_ch = cfg['in_ch'], cfg['out_ch']
        branches = []
        for k in cfg['ks']:
            s = 1.0 / math.sqrt(in_ch * k)
            branches.append(dict(
                W=jax.random.uniform(next(keys), (out_ch, in_ch, k), jnp.float32, -s, s),
                b=jax.random.uniform(next(keys), (out_ch,), jnp.float32, -s, s),
                gamma=1.0 + 0.1 * jax.random.normal(next(keys), (out_ch,), jnp.float32),
                beta=0.1 * jax.random.normal(next(keys), (out_ch,), jnp.float32),
                mean=0.1 * jax.random.normal(next(keys), (out_ch,), jnp.float32),
                var=jax.random.uniform(next(keys), (out_ch,), jnp.float32, 0.5, 1.5),
            ))
        s = 1.0 / math.sqrt(3 * out_ch)
        PW = jax.random.uniform(next(keys), (out_ch, 3 * out_ch), jnp.float32, -s, s)
        Pb = jax.random.uniform(next(keys), (out_ch,), jnp.float32, -s, s)
        blocks.append(dict(branches=branches, PW=PW, Pb=Pb))
    fw = jax.random.uniform(next(keys), (), jnp.float32, -1.0, 1.0)   # final Conv1d(1,1,1)
    fb = jax.random.uniform(next(keys), (), jnp.float32, -0.1, 0.1)
    return dict(Wd=Wd, bd=bd, blocks=blocks, fw=fw, fb=fb)


# -------------- one-time host-side packing (hoisted out of forward) ----------
def pack_decoder(raw, cfgs):
    """Fold every linear stage into dense (matrix, bias) operators on the flat
    (channel*length) feature layout, then pre-multiply each adjacent linear
    pair (decondenser@branch-ops, pooling@next-branch-ops) — exact since there
    is no nonlinearity between them.  Result: N_BLOCK+1 matmul operators with
    explicit bias vectors; ReLU follows all but the last."""
    Wd = np.asarray(raw['Wd'], np.float32)
    bd = np.asarray(raw['bd'], np.float32)
    C_dec, K_dec = Wd.shape[1], Wd.shape[2]
    W0 = Wd.reshape(Z_DIM, C_dec * K_dec)            # decondenser on length-1 input
    b0 = np.repeat(bd, K_dec)

    stages = []                                      # per block: (M, bm, P, bp)
    for i_blk, (blk, cfg) in enumerate(zip(raw['blocks'], cfgs)):
        in_ch, out_ch = cfg['in_ch'], cfg['out_ch']
        L_in, L_out = cfg['L_in'], cfg['L_out']
        Fin, Fbr = in_ch * L_in, out_ch * L_out
        U = upsample_matrix(L_in, L_out)             # (L_out, L_in)

        cols, bias = [], []
        for br in blk['branches']:
            W = np.asarray(br['W'], np.float32)
            b = np.asarray(br['b'], np.float32)
            gamma = np.asarray(br['gamma'], np.float32)
            beta = np.asarray(br['beta'], np.float32)
            mean = np.asarray(br['mean'], np.float32)
            var = np.asarray(br['var'], np.float32)
            k = W.shape[-1]
            p = k // 2
            scale = gamma / np.sqrt(var + BN_EPS)    # fold eval-mode BN
            Wf = W * scale[:, None, None]
            bf = (b - mean) * scale + beta
            Upad = np.pad(U, ((p, p), (0, 0)))       # conv 'same' zero-pad rows
            Ushift = np.stack([Upad[j:j + L_out] for j in range(k)], 0)   # (k, L_out, L_in)
            M4 = np.einsum('ocj,jtl->clot', Wf, Ushift)                   # (in, L_in, out, L_out)
            cols.append(M4.reshape(Fin, Fbr))
            bias.append(np.repeat(bf, L_out))
        M = np.concatenate(cols, axis=1)             # fused upsample+conv+BN, all branches
        bm = np.concatenate(bias)

        # 1x1 channel-pooling conv as a block-diagonal matrix on the flat layout
        PW = np.asarray(blk['PW'], np.float32)
        Pb = np.asarray(blk['Pb'], np.float32)
        eye = np.eye(L_out, dtype=np.float32)
        P = np.einsum('oc,ts->ctos', PW, eye).reshape(3 * Fbr, Fbr)
        bp = np.repeat(Pb, L_out)
        if i_blk == len(cfgs) - 1:                   # fold final Conv1d(1,1,1) (exact)
            fw = float(raw['fw'])
            fb = float(raw['fb'])
            P = fw * P
            bp = fw * bp + fb
        stages.append((M, bm, P, bp))

    # Fuse adjacent linear stages: [W0@M0, P0@M1, ..., P_{n-1}]
    mats, biases = [], []
    A, Bv = W0, b0
    for (M, bm, P, bp) in stages:
        A = A @ M
        Bv = Bv @ M + bm
        mats.append(A.astype(np.float32))            # ReLU follows this stage
        biases.append(Bv.astype(np.float32))
        A, Bv = P, bp
    mats.append(A.astype(np.float32))                # final linear stage (no ReLU)
    biases.append(Bv.astype(np.float32))

    # Single pre-padded bias slab (one DMA descriptor instead of one per stage).
    Fmax = max(b.shape[0] for b in biases)
    bias_slab = np.zeros((len(biases), Fmax), np.float32)
    for i, b in enumerate(biases):
        bias_slab[i, :b.shape[0]] = b

    return dict(mats=tuple(jnp.asarray(m) for m in mats),
                bias=jnp.asarray(bias_slab))


# --------------------------------- kernel ------------------------------------
def _make_kernel(n_mats, widths):
    def kernel(*refs):
        x_ref = refs[0]
        mat_refs = refs[1:1 + n_mats]
        bias_ref = refs[1 + n_mats]
        o_ref = refs[-1]
        h = x_ref[...]                                           # (TILE_B, z_dim)
        for i, m_ref in enumerate(mat_refs):
            h = jnp.dot(h, m_ref[...], preferred_element_type=jnp.float32)
            h = h + bias_ref[i:i + 1, :widths[i]]                # VPU broadcast bias add
            if i < n_mats - 1:
                h = jnp.maximum(h, 0.0)
        o_ref[...] = h
    return kernel


# --------------------------------- wrapper ------------------------------------
def _round_up(n, m):
    return (n + m - 1) // m * m


def decoder_forward(x, packed, *, tile_b=256):
    mats = packed['mats']
    bias = packed['bias']
    n_mats = len(mats)
    widths = tuple(int(m.shape[1]) for m in mats)                # (384, 96, 32)
    out_dim = widths[-1]
    z = int(mats[0].shape[0])

    B = x.shape[0]
    x2 = x[:, :, 0].astype(jnp.float32)                          # out = x.float(); length-1 bottleneck
    tb = min(tile_b, _round_up(B, 8))                            # sublane granule / batch tile
    B_pad = _round_up(B, tb)
    x_pad = jnp.pad(x2, ((0, B_pad - B), (0, 0)))

    kernel = _make_kernel(n_mats, widths)

    in_specs = [pl.BlockSpec((tb, z), lambda b: (b, 0))]
    for m in mats:                                               # weights resident across grid steps
        in_specs.append(pl.BlockSpec(m.shape, lambda b: (0, 0)))
    in_specs.append(pl.BlockSpec(bias.shape, lambda b: (0, 0)))

    out = pl.pallas_call(
        kernel,
        out_shape=jax.ShapeDtypeStruct((B_pad, out_dim), jnp.float32),
        grid=(B_pad // tb,),
        in_specs=in_specs,
        out_specs=pl.BlockSpec((tb, out_dim), lambda b: (b, 0)),
        compiler_params=pltpu.CompilerParams(
            dimension_semantics=("parallel",)),                  # megacore sharding on v7x
    )(x_pad, *mats, bias)
    return out[:B]                                               # == out.reshape(out.size(0), -1)


# ------------------------- pure-JAX reference (check) --------------------------
def ref_decoder(x, raw, cfgs):
    h = jnp.einsum('bz,zck->bck', x[:, :, 0].astype(jnp.float32), raw['Wd']) \
        + raw['bd'][None, :, None]
    for blk, cfg in zip(raw['blocks'], cfgs):
        U = jnp.asarray(upsample_matrix(h.shape[-1], cfg['L_out']))   # (L_out, L_in)
        up = jnp.einsum('bcl,tl->bct', h, U)
        outs = []
        for br in blk['branches']:
            k = br['W'].shape[-1]
            p = k // 2
            y = jax.lax.conv_general_dilated(up, br['W'], window_strides=(1,),
                                             padding=[(p, p)],
                                             dimension_numbers=('NCH', 'OIH', 'NCH'))
            y = y + br['b'][None, :, None]
            y = (y - br['mean'][None, :, None]) * (
                br['gamma'][None, :, None] / jnp.sqrt(br['var'][None, :, None] + BN_EPS)
            ) + br['beta'][None, :, None]
            outs.append(jnp.maximum(y, 0.0))
        cat = jnp.concatenate(outs, axis=1)
        h = jnp.einsum('oc,bct->bot', blk['PW'], cat) + blk['Pb'][None, :, None]
    out = raw['fw'] * h + raw['fb']
    return out.reshape(out.shape[0], -1)


if __name__ == "__main__":
    key = jax.random.PRNGKey(0)
    kx, kp = jax.random.split(key)
    x = jax.random.normal(kx, (2, Z_DIM, 1), jnp.float32)        # (B, bottleneck_dim, 1)

    cfgs = build_cfgs()
    raw = init_params(kp, cfgs)
    packed = pack_decoder(raw, cfgs)                             # one-time host-side packing

    fwd = jax.jit(decoder_forward)
    out = jax.block_until_ready(fwd(x, packed))

    ref = ref_decoder(x, raw, cfgs)
    np.testing.assert_allclose(np.asarray(out), np.asarray(ref), rtol=1e-4, atol=1e-4)
    assert out.shape == (2, ENCODER_LAYER_DIMS[0])
    print("KERNEL_OK")
</pallas_src>

<mosaic_0001>
module attributes {stable_mosaic.version = 11 : i64} {
  func.func @kernel(%arg0: i32, %arg1: memref<8x4xf32, #tpu.memory_space<vmem>>, %arg2: memref<4x384xf32, #tpu.memory_space<vmem>>, %arg3: memref<384x96xf32, #tpu.memory_space<vmem>>, %arg4: memref<96x32xf32, #tpu.memory_space<vmem>>, %arg5: memref<3x384xf32, #tpu.memory_space<vmem>>, %arg6: memref<8x32xf32, #tpu.memory_space<vmem>>) attributes {dimension_semantics = [#tpu.dimension_semantics<parallel>], iteration_bounds = array<i64: 1>, scalar_prefetch = 0 : i64, scratch_operands = 0 : i64, tpu.core_type = #tpu.core_type<tc>, window_params = [{transform_indices = @transform_0, window_bounds = array<i64: 8, 4>}, {pipeline_mode = #tpu.pipeline_mode<synchronous>, transform_indices = @transform_1, window_bounds = array<i64: 4, 384>}, {pipeline_mode = #tpu.pipeline_mode<synchronous>, transform_indices = @transform_2, window_bounds = array<i64: 384, 96>}, {pipeline_mode = #tpu.pipeline_mode<synchronous>, transform_indices = @transform_3, window_bounds = array<i64: 96, 32>}, {pipeline_mode = #tpu.pipeline_mode<synchronous>, transform_indices = @transform_4, window_bounds = array<i64: 3, 384>}, {transform_indices = @transform_5, window_bounds = array<i64: 8, 32>}]} {
    %c0 = arith.constant 0 : index
    %c0_0 = arith.constant 0 : index
    %0 = vector.load %arg1[%c0, %c0_0] : memref<8x4xf32, #tpu.memory_space<vmem>>, vector<8x4xf32>
    %c0_1 = arith.constant 0 : index
    %c0_2 = arith.constant 0 : index
    %1 = vector.load %arg2[%c0_1, %c0_2] : memref<4x384xf32, #tpu.memory_space<vmem>>, vector<4x384xf32>
    %cst = arith.constant dense<0.000000e+00> : vector<8x384xf32>
    %2 = tpu.matmul %0, %1, %cst {dimension_numbers = #tpu.dot_dimension_numbers<[1], [0], [0], [1], [0, 0, 1, 1], [], []>} : vector<8x4xf32>, vector<4x384xf32>, vector<8x384xf32> -> vector<8x384xf32>
    %c0_3 = arith.constant 0 : index
    %c0_4 = arith.constant 0 : index
    %3 = vector.load %arg5[%c0_3, %c0_4] : memref<3x384xf32, #tpu.memory_space<vmem>>, vector<1x384xf32>
    %4 = vector.broadcast %3 : vector<1x384xf32> to vector<8x384xf32>
    %5 = arith.addf %2, %4 : vector<8x384xf32>
    %cst_5 = arith.constant 0.000000e+00 : f32
    %6 = vector.broadcast %cst_5 : f32 to vector<8x384xf32>
    %7 = arith.maximumf %5, %6 : vector<8x384xf32>
    %c0_6 = arith.constant 0 : index
    %c0_7 = arith.constant 0 : index
    %8 = vector.load %arg3[%c0_6, %c0_7] : memref<384x96xf32, #tpu.memory_space<vmem>>, vector<384x96xf32>
    %cst_8 = arith.constant dense<0.000000e+00> : vector<8x96xf32>
    %9 = tpu.matmul %7, %8, %cst_8 {dimension_numbers = #tpu.dot_dimension_numbers<[1], [0], [0], [1], [0, 0, 1, 1], [], []>} : vector<8x384xf32>, vector<384x96xf32>, vector<8x96xf32> -> vector<8x96xf32>
    %c1 = arith.constant 1 : index
    %c0_9 = arith.constant 0 : index
    %10 = vector.load %arg5[%c1, %c0_9] : memref<3x384xf32, #tpu.memory_space<vmem>>, vector<1x96xf32>
    %11 = vector.broadcast %10 : vector<1x96xf32> to vector<8x96xf32>
    %12 = arith.addf %9, %11 : vector<8x96xf32>
    %cst_10 = arith.constant 0.000000e+00 : f32
    %13 = vector.broadcast %cst_10 : f32 to vector<8x96xf32>
    %14 = arith.maximumf %12, %13 : vector<8x96xf32>
    %c0_11 = arith.constant 0 : index
    %c0_12 = arith.constant 0 : index
    %15 = vector.load %arg4[%c0_11, %c0_12] : memref<96x32xf32, #tpu.memory_space<vmem>>, vector<96x32xf32>
    %cst_13 = arith.constant dense<0.000000e+00> : vector<8x32xf32>
    %16 = tpu.matmul %14, %15, %cst_13 {dimension_numbers = #tpu.dot_dimension_numbers<[1], [0], [0], [1], [0, 0, 1, 1], [], []>} : vector<8x96xf32>, vector<96x32xf32>, vector<8x32xf32> -> vector<8x32xf32>
    %c2 = arith.constant 2 : index
    %c0_14 = arith.constant 0 : index
    %17 = vector.load %arg5[%c2, %c0_14] : memref<3x384xf32, #tpu.memory_space<vmem>>, vector<1x32xf32>
    %18 = vector.broadcast %17 : vector<1x32xf32> to vector<8x32xf32>
    %19 = arith.addf %16, %18 : vector<8x32xf32>
    %c0_15 = arith.constant 0 : index
    %c0_16 = arith.constant 0 : index
    %20 = vector.load %arg6[%c0_15, %c0_16] : memref<8x32xf32, #tpu.memory_space<vmem>>, vector<8x32xf32>
    tpu.vector_store %arg6[%c0_15, %c0_16], %19 {strides = array<i32>} : memref<8x32xf32, #tpu.memory_space<vmem>>, vector<8x32xf32>,
    return
  }
  func.func @transform_0(%arg0: i32) -> (i32, i32) {
    %c0_i32 = arith.constant 0 : i32
    %c0_i32_0 = arith.constant 0 : i32
    return %arg0, %c0_i32 : i32, i32
  }
  func.func @transform_1(%arg0: i32) -> (i32, i32) {
    %c0_i32 = arith.constant 0 : i32
    %c0_i32_0 = arith.constant 0 : i32
    %c0_i32_1 = arith.constant 0 : i32
    return %c0_i32, %c0_i32_0 : i32, i32
  }
  func.func @transform_2(%arg0: i32) -> (i32, i32) {
    %c0_i32 = arith.constant 0 : i32
    %c0_i32_0 = arith.constant 0 : i32
    %c0_i32_1 = arith.constant 0 : i32
    return %c0_i32, %c0_i32_0 : i32, i32
  }
  func.func @transform_3(%arg0: i32) -> (i32, i32) {
    %c0_i32 = arith.constant 0 : i32
    %c0_i32_0 = arith.constant 0 : i32
    %c0_i32_1 = arith.constant 0 : i32
    return %c0_i32, %c0_i32_0 : i32, i32
  }
  func.func @transform_4(%arg0: i32) -> (i32, i32) {
    %c0_i32 = arith.constant 0 : i32
    %c0_i32_0 = arith.constant 0 : i32
    %c0_i32_1 = arith.constant 0 : i32
    return %c0_i32, %c0_i32_0 : i32, i32
  }
  func.func @transform_5(%arg0: i32) -> (i32, i32) {
    %c0_i32 = arith.constant 0 : i32
    %c0_i32_0 = arith.constant 0 : i32
    return %arg0, %c0_i32 : i32, i32
  }
}

</mosaic_0001>

<llo_original>
// kernel: decoder_forward.1
$region0: #{decoder_forward.1}
  #allocation0 [shape = 'u32[]', space=smem, size = 0x4, offset = 0x4, fixed_abs, tag = 'smem constant byte address 0x4 - core index']
  #allocation1 [shape = 'u32[144,128]{1,0:T(1,128)}', space=vmem, size = 0x12000, scoped, tag = 'internal scratch']
  %s0 = inlined_call_operand.vmem [shape: f32[8,4], index: 0, kind: input, shape index: {}]
  %s1 = inlined_call_operand.vmem [shape: f32[4,384], index: 1, kind: input, shape index: {}]
  %s2 = inlined_call_operand.vmem [shape: f32[384,96], index: 2, kind: input, shape index: {}]
  %s3 = inlined_call_operand.vmem [shape: f32[96,32], index: 3, kind: input, shape index: {}]
  %s4 = inlined_call_operand.vmem [shape: f32[3,384], index: 4, kind: input, shape index: {}]
  %s5 = inlined_call_operand.vmem [shape: f32[8,32], index: 5, kind: output, shape index: {}]
  %s6 = sld [smem:[#allocation0]]
  $region30: #{decoder_forward.1} parent=0
    _
  %s8 = ssub.s32 1, %s6
  %s9 = scalar_select 0, %s8, %s6
  // Predicated region
  $region2: #{decoder_forward.1} parent=0 // pred_check
    _
  $region3: #{decoder_forward.1} parent=0 // pred_check_branch
    %11 = sbr.rel (0) target = $region5
  $region4: #{decoder_forward.1} parent=0 // pred_region
    _
  $region5: #{decoder_forward.1} parent=0 // pred_fallthru
    _
  // Predicated region
  $region6: #{decoder_forward.1} parent=0 // pred_check
    _
  $region7: #{decoder_forward.1} parent=0 // pred_check_branch
    %13 = sbr.rel (0) target = $region9
  $region8: #{decoder_forward.1} parent=0 // pred_region
    _
  $region9: #{decoder_forward.1} parent=0 // pred_fallthru
    _
  // Predicated region
  $region10: #{decoder_forward.1} parent=0 // pred_check
    _
  $region11: #{decoder_forward.1} parent=0 // pred_check_branch
    %15 = sbr.rel (0) target = $region13
  $region12: #{decoder_forward.1} parent=0 // pred_region
    _
  $region13: #{decoder_forward.1} parent=0 // pred_fallthru
    _
  // Predicated region
  $region14: #{decoder_forward.1} parent=0 // pred_check
    _
  $region15: #{decoder_forward.1} parent=0 // pred_check_branch
    %17 = sbr.rel (0) target = $region17
  $region16: #{decoder_forward.1} parent=0 // pred_region
    _
  $region17: #{decoder_forward.1} parent=0 // pred_fallthru
    _
  // Predicated region
  $region18: #{decoder_forward.1} parent=0 // pred_check
    _
  $region19: #{decoder_forward.1} parent=0 // pred_check_branch
    %19 = sbr.rel (0) target = $region21
  $region20: #{decoder_forward.1} parent=0 // pred_region
    _
  $region21: #{decoder_forward.1} parent=0 // pred_fallthru
    _
  %v20 = vld [vmem:[%s0] sm:$0xff]
  %v21 = vld [vmem:[%s1] sm:$0xff]
  %v22 = vld [vmem:[%s1 + $0x8] sm:$0xf]
  %v23 = vld [vmem:[%s4] ss:$4 sm:$0x7]
  %v25 = vlaneseq
  %v26 = vshrl.u32 %v25, 7
  %v27 = vsub.s32 0, %v26
  %v28 = vrot.slane %v23, %v27
  %v29 = vlaneseq
  %v30 = vshrl.u32 %v29, 7
  %v31 = vsub.s32 1, %v30
  %v32 = vrot.slane %v23, %v31
  %v33 = vlaneseq
  %v34 = vshrl.u32 %v33, 7
  %v35 = vsub.s32 2, %v34
  %v36 = vrot.slane %v23, %v35
  %v42 = vcombine.high %v21, %v21
  %vm43 = vcmask 31744
  %v45 = vsel %vm43, %v20, 0
  %vm47 = vcmask 1043456
  %v48 = vsel %vm47, %v21, 0
  %v50 = vsel %vm47, %v42, 0
  %v52 = vsel %vm47, %v22, 0
  %54 = vmatprep.subr.mxu0 %v50
  %55 = vmatpush1.msra.mxu0 %v48
  %56 = vmatprep.subr.mxu0 0.0
  %57 = vmatpush1.msra.mxu0 0.0
  %58 = vmatprep.subr.mxu0 0.0
  %59 = vmatpush1.msra.mxu0 0.0
  %60 = vmatprep.subr.mxu0 0.0
  %61 = vmatpush1.msra.mxu0 0.0
  %62 = vmatprep.subr.mxu0 0.0
  %63 = vmatpush1.msra.mxu0 0.0
  %64 = vmatprep.subr.mxu0 0.0
  %65 = vmatpush1.msra.mxu0 0.0
  %66 = vmatprep.subr.mxu0 0.0
  %67 = vmatpush1.msra.mxu0 0.0
  %68 = vmatprep.subr.mxu0 0.0
  %69 = vmatpush1.msra.mxu0 0.0
  %70 = vmatprep.subr.mxu0 0.0
  %71 = vmatpush1.msra.mxu0 0.0
  %72 = vmatprep.subr.mxu0 0.0
  %73 = vmatpush1.msra.mxu0 0.0
  %74 = vmatprep.subr.mxu0 0.0
  %75 = vmatpush1.msra.mxu0 0.0
  %76 = vmatprep.subr.mxu0 0.0
  %77 = vmatpush1.msra.mxu0 0.0
  %78 = vmatprep.subr.mxu0 0.0
  %79 = vmatpush1.msra.mxu0 0.0
  %80 = vmatprep.subr.mxu0 0.0
  %81 = vmatpush1.msra.mxu0 0.0
  %82 = vmatprep.subr.mxu0 0.0
  %83 = vmatpush1.msra.mxu0 0.0
  %84 = vmatprep.subr.mxu0 0.0
  %85 = vmatpush1.msra.mxu0 0.0
  %86 = vmatprep.subr.mxu0 0.0
  %87 = vmatpush1.msra.mxu0 0.0
  %88 = vmatprep.subr.mxu0 0.0
  %89 = vmatpush1.msra.mxu0 0.0
  %90 = vmatprep.subr.mxu0 0.0
  %91 = vmatpush1.msra.mxu0 0.0
  %92 = vmatprep.subr.mxu0 0.0
  %93 = vmatpush1.msra.mxu0 0.0
  %94 = vmatprep.subr.mxu0 0.0
  %95 = vmatpush1.msra.mxu0 0.0
  %96 = vmatprep.subr.mxu0 0.0
  %97 = vmatpush1.msra.mxu0 0.0
  %98 = vmatprep.subr.mxu0 0.0
  %99 = vmatpush1.msra.mxu0 0.0
  %100 = vmatprep.subr.mxu0 0.0
  %101 = vmatpush1.msra.mxu0 0.0
  %102 = vmatprep.subr.mxu0 0.0
  %103 = vmatpush1.msra.mxu0 0.0
  %104 = vmatprep.subr.mxu0 0.0
  %105 = vmatpush1.msra.mxu0 0.0
  %106 = vmatprep.subr.mxu0 0.0
  %107 = vmatpush1.msra.mxu0 0.0
  %108 = vmatprep.subr.mxu0 0.0
  %109 = vmatpush1.msra.mxu0 0.0
  %110 = vmatprep.subr.mxu0 0.0
  %111 = vmatpush1.msra.mxu0 0.0
  %112 = vmatprep.subr.mxu0 0.0
  %113 = vmatpush1.msra.mxu0 0.0
  %114 = vmatprep.subr.mxu0 0.0
  %115 = vmatpush1.msra.mxu0 0.0
  %116 = vmatprep.subr.mxu0 0.0
  %117 = vmatpush1.msra.mxu0 0.0
  %118 = vmatprep.mubr.f32.mxu0 0.0
  %119 = vmatmul.mubr.f32.gmra.mrb[0].mxu0 %v45
  %v120 = vpop.f32.mrb[0].mxu0
  %v121 = vadd.f32 %v28, %v120
  %v122 = vpop.f32.mrb[0].mxu0
  %v123 = vadd.f32 %v32, %v122
  %124 = vdwg.mxu0
  %125 = vmatprep.subr.mxu0 0.0
  %126 = vmatpush1.msra.mxu0 %v52
  %127 = vmatprep.subr.mxu0 0.0
  %128 = vmatpush1.msra.mxu0 0.0
  %129 = vmatprep.subr.mxu0 0.0
  %130 = vmatpush1.msra.mxu0 0.0
  %131 = vmatprep.subr.mxu0 0.0
  %132 = vmatpush1.msra.mxu0 0.0
  %133 = vmatprep.subr.mxu0 0.0
  %134 = vmatpush1.msra.mxu0 0.0
  %135 = vmatprep.subr.mxu0 0.0
  %136 = vmatpush1.msra.mxu0 0.0
  %137 = vmatprep.subr.mxu0 0.0
  %138 = vmatpush1.msra.mxu0 0.0
  %139 = vmatprep.subr.mxu0 0.0
  %140 = vmatpush1.msra.mxu0 0.0
  %141 = vmatprep.subr.mxu0 0.0
  %142 = vmatpush1.msra.mxu0 0.0
  %143 = vmatprep.subr.mxu0 0.0
  %144 = vmatpush1.msra.mxu0 0.0
  %145 = vmatprep.subr.mxu0 0.0
  %146 = vmatpush1.msra.mxu0 0.0
  %147 = vmatprep.subr.mxu0 0.0
  %148 = vmatpush1.msra.mxu0 0.0
  %149 = vmatprep.subr.mxu0 0.0
  %150 = vmatpush1.msra.mxu0 0.0
  %151 = vmatprep.subr.mxu0 0.0
  %152 = vmatpush1.msra.mxu0 0.0
  %153 = vmatprep.subr.mxu0 0.0
  %154 = vmatpush1.msra.mxu0 0.0
  %155 = vmatprep.subr.mxu0 0.0
  %156 = vmatpush1.msra.mxu0 0.0
  %157 = vmatprep.subr.mxu0 0.0
  %158 = vmatpush1.msra.mxu0 0.0
  %159 = vmatprep.subr.mxu0 0.0
  %160 = vmatpush1.msra.mxu0 0.0
  %161 = vmatprep.subr.mxu0 0.0
  %162 = vmatpush1.msra.mxu0 0.0
  %163 = vmatprep.subr.mxu0 0.0
  %164 = vmatpush1.msra.mxu0 0.0
  %165 = vmatprep.subr.mxu0 0.0
  %166 = vmatpush1.msra.mxu0 0.0
  %167 = vmatprep.subr.mxu0 0.0
  %168 = vmatpush1.msra.mxu0 0.0
  %169 = vmatprep.subr.mxu0 0.0
  %170 = vmatpush1.msra.mxu0 0.0
  %171 = vmatprep.subr.mxu0 0.0
  %172 = vmatpush1.msra.mxu0 0.0
  %173 = vmatprep.subr.mxu0 0.0
  %174 = vmatpush1.msra.mxu0 0.0
  %175 = vmatprep.subr.mxu0 0.0
  %176 = vmatpush1.msra.mxu0 0.0
  %177 = vmatprep.subr.mxu0 0.0
  %178 = vmatpush1.msra.mxu0 0.0
  %179 = vmatprep.subr.mxu0 0.0
  %180 = vmatpush1.msra.mxu0 0.0
  %181 = vmatprep.subr.mxu0 0.0
  %182 = vmatpush1.msra.mxu0 0.0
  %183 = vmatprep.subr.mxu0 0.0
  %184 = vmatpush1.msra.mxu0 0.0
  %185 = vmatprep.subr.mxu0 0.0
  %186 = vmatpush1.msra.mxu0 0.0
  %187 = vmatprep.subr.mxu0 0.0
  %188 = vmatpush1.msra.mxu0 0.0
  %189 = vmatprep.mubr.f32.mxu0 0.0
  %190 = vmatmul.mubr.f32.gmra.mrb[0].mxu0 %v45
  %v191 = vpop.f32.mrb[0].mxu0
  %v192 = vadd.f32 %v36, %v191
  %v193 = vpop.f32.mrb[0].mxu0
  %194 = vdwg.mxu0
  %v195 = vmax.f32 %v121, 0.0
  %v196 = vmax.f32 %v123, 0.0
  %v197 = vmax.f32 %v192, 0.0
  %v198 = vld [vmem:[%s2] sm:$0xff]
  %v199 = vld [vmem:[%s2 + $0x8] sm:$0xff]
  %v200 = vld [vmem:[%s2 + $0x10] sm:$0xff]
  %v201 = vld [vmem:[%s2 + $0x18] sm:$0xff]
  %v202 = vld [vmem:[%s2 + $0x20] sm:$0xff]
  %v203 = vld [vmem:[%s2 + $0x28] sm:$0xff]
  %v204 = vld [vmem:[%s2 + $0x30] sm:$0xff]
  %v205 = vld [vmem:[%s2 + $0x38] sm:$0xff]
  %v206 = vld [vmem:[%s2 + $0x40] sm:$0xff]
  %v207 = vld [vmem:[%s2 + $0x48] sm:$0xff]
  %v208 = vld [vmem:[%s2 + $0x50] sm:$0xff]
  %v209 = vld [vmem:[%s2 + $0x58] sm:$0xff]
  %v210 = vld [vmem:[%s2 + $0x60] sm:$0xff]
  %v211 = vld [vmem:[%s2 + $0x68] sm:$0xff]
  %v212 = vld [vmem:[%s2 + $0x70] sm:$0xff]
  %v213 = vld [vmem:[%s2 + $0x78] sm:$0xff]
  %v214 = vld [vmem:[%s2 + $0x80] sm:$0xff]
  %v215 = vld [vmem:[%s2 + $0x88] sm:$0xff]
  %v216 = vld [vmem:[%s2 + $0x90] sm:$0xff]
  %v217 = vld [vmem:[%s2 + $0x98] sm:$0xff]
  %v218 = vld [vmem:[%s2 + $0xa0] sm:$0xff]
  %v219 = vld [vmem:[%s2 + $0xa8] sm:$0xff]
  %v220 = vld [vmem:[%s2 + $0xb0] sm:$0xff]
  %v221 = vld [vmem:[%s2 + $0xb8] sm:$0xff]
  %v222 = vld [vmem:[%s2 + $0xc0] sm:$0xff]
  %v223 = vld [vmem:[%s2 + $0xc8] sm:$0xff]
  %v224 = vld [vmem:[%s2 + $0xd0] sm:$0xff]
  %v225 = vld [vmem:[%s2 + $0xd8] sm:$0xff]
  %v226 = vld [vmem:[%s2 + $0xe0] sm:$0xff]
  %v227 = vld [vmem:[%s2 + $0xe8] sm:$0xff]
  %v228 = vld [vmem:[%s2 + $0xf0] sm:$0xff]
  %v229 = vld [vmem:[%s2 + $0xf8] sm:$0xff]
  %v230 = vld [vmem:[%s2 + $0x100] sm:$0xff]
  %v231 = vld [vmem:[%s2 + $0x108] sm:$0xff]
  %v232 = vld [vmem:[%s2 + $0x110] sm:$0xff]
  %v233 = vld [vmem:[%s2 + $0x118] sm:$0xff]
  %v234 = vld [vmem:[%s2 + $0x120] sm:$0xff]
  %v235 = vld [vmem:[%s2 + $0x128] sm:$0xff]
  %v236 = vld [vmem:[%s2 + $0x130] sm:$0xff]
  %v237 = vld [vmem:[%s2 + $0x138] sm:$0xff]
  %v238 = vld [vmem:[%s2 + $0x140] sm:$0xff]
  %v239 = vld [vmem:[%s2 + $0x148] sm:$0xff]
  %v240 = vld [vmem:[%s2 + $0x150] sm:$0xff]
  %v241 = vld [vmem:[%s2 + $0x158] sm:$0xff]
  %v242 = vld [vmem:[%s2 + $0x160] sm:$0xff]
  %v243 = vld [vmem:[%s2 + $0x168] sm:$0xff]
  %v244 = vld [vmem:[%s2 + $0x170] sm:$0xff]
  %v245 = vld [vmem:[%s2 + $0x178] sm:$0xff]
  %v246 = vld [vmem:[%s4 + $0x1] sm:$0x1]
  %v247 = vlaneseq
  %v248 = vshrl.u32 %v247, 7
  %v249 = vsub.s32 0, %v248
  %v250 = vrot.slane %v246, %v249
  %251 = vmatprep.subr.mxu0 0.0
  %252 = vmatpush1.msra.mxu0 %v198
  %253 = vmatprep.subr.mxu0 0.0
  %254 = vmatpush1.msra.mxu0 %v199
  %255 = vmatprep.subr.mxu0 0.0
  %256 = vmatpush1.msra.mxu0 %v200
  %257 = vmatprep.subr.mxu0 0.0
  %258 = vmatpush1.msra.mxu0 %v201
  %259 = vmatprep.subr.mxu0 0.0
  %260 = vmatpush1.msra.mxu0 %v202
  %261 = vmatprep.subr.mxu0 0.0
  %262 = vmatpush1.msra.mxu0 %v203
  %263 = vmatprep.subr.mxu0 0.0
  %264 = vmatpush1.msra.mxu0 %v204
  %265 = vmatprep.subr.mxu0 0.0
  %266 = vmatpush1.msra.mxu0 %v205
  %267 = vmatprep.subr.mxu0 0.0
  %268 = vmatpush1.msra.mxu0 %v206
  %269 = vmatprep.subr.mxu0 0.0
  %270 = vmatpush1.msra.mxu0 %v207
  %271 = vmatprep.subr.mxu0 0.0
  %272 = vmatpush1.msra.mxu0 %v208
  %273 = vmatprep.subr.mxu0 0.0
  %274 = vmatpush1.msra.mxu0 %v209
  %275 = vmatprep.subr.mxu0 0.0
  %276 = vmatpush1.msra.mxu0 %v210
  %277 = vmatprep.subr.mxu0 0.0
  %278 = vmatpush1.msra.mxu0 %v211
  %279 = vmatprep.subr.mxu0 0.0
  %280 = vmatpush1.msra.mxu0 %v212
  %281 = vmatprep.subr.mxu0 0.0
  %282 = vmatpush1.msra.mxu0 %v213
  %283 = vmatprep.subr.mxu0 0.0
  %284 = vmatpush1.msra.mxu0 %v214
  %285 = vmatprep.subr.mxu0 0.0
  %286 = vmatpush1.msra.mxu0 %v215
  %287 = vmatprep.subr.mxu0 0.0
  %288 = vmatpush1.msra.mxu0 %v216
  %289 = vmatprep.subr.mxu0 0.0
  %290 = vmatpush1.msra.mxu0 %v217
  %291 = vmatprep.subr.mxu0 0.0
  %292 = vmatpush1.msra.mxu0 %v218
  %293 = vmatprep.subr.mxu0 0.0
  %294 = vmatpush1.msra.mxu0 %v219
  %295 = vmatprep.subr.mxu0 0.0
  %296 = vmatpush1.msra.mxu0 %v220
  %297 = vmatprep.subr.mxu0 0.0
  %298 = vmatpush1.msra.mxu0 %v221
  %299 = vmatprep.subr.mxu0 0.0
  %300 = vmatpush1.msra.mxu0 %v222
  %301 = vmatprep.subr.mxu0 0.0
  %302 = vmatpush1.msra.mxu0 %v223
  %303 = vmatprep.subr.mxu0 0.0
  %304 = vmatpush1.msra.mxu0 %v224
  %305 = vmatprep.subr.mxu0 0.0
  %306 = vmatpush1.msra.mxu0 %v225
  %307 = vmatprep.subr.mxu0 0.0
  %308 = vmatpush1.msra.mxu0 %v226
  %309 = vmatprep.subr.mxu0 0.0
  %310 = vmatpush1.msra.mxu0 %v227
  %311 = vmatprep.subr.mxu0 0.0
  %312 = vmatpush1.msra.mxu0 %v228
  %313 = vmatprep.subr.mxu0 0.0
  %314 = vmatpush1.msra.mxu0 %v229
  %315 = vmatprep.mubr.f32.mxu0 %v196
  %316 = vmatmul.mubr.f32.gmra.mrb[0].mxu0 %v195
  %v317 = vpop.f32.mrb[0].mxu0
  %v318 = vadd.f32 %v250, %v317
  %v319 = vpop.f32.mrb[0].mxu0
  %320 = vdwg.mxu0
  %321 = vmatprep.subr.mxu0 0.0
  %322 = vmatpush1.msra.mxu0 %v230
  %323 = vmatprep.subr.mxu0 0.0
  %324 = vmatpush1.msra.mxu0 %v231
  %325 = vmatprep.subr.mxu0 0.0
  %326 = vmatpush1.msra.mxu0 %v232
  %327 = vmatprep.subr.mxu0 0.0
  %328 = vmatpush1.msra.mxu0 %v233
  %329 = vmatprep.subr.mxu0 0.0
  %330 = vmatpush1.msra.mxu0 %v234
  %331 = vmatprep.subr.mxu0 0.0
  %332 = vmatpush1.msra.mxu0 %v235
  %333 = vmatprep.subr.mxu0 0.0
  %334 = vmatpush1.msra.mxu0 %v236
  %335 = vmatprep.subr.mxu0 0.0
  %336 = vmatpush1.msra.mxu0 %v237
  %337 = vmatprep.subr.mxu0 0.0
  %338 = vmatpush1.msra.mxu0 %v238
  %339 = vmatprep.subr.mxu0 0.0
  %340 = vmatpush1.msra.mxu0 %v239
  %341 = vmatprep.subr.mxu0 0.0
  %342 = vmatpush1.msra.mxu0 %v240
  %343 = vmatprep.subr.mxu0 0.0
  %344 = vmatpush1.msra.mxu0 %v241
  %345 = vmatprep.subr.mxu0 0.0
  %346 = vmatpush1.msra.mxu0 %v242
  %347 = vmatprep.subr.mxu0 0.0
  %348 = vmatpush1.msra.mxu0 %v243
  %349 = vmatprep.subr.mxu0 0.0
  %350 = vmatpush1.msra.mxu0 %v244
  %351 = vmatprep.subr.mxu0 0.0
  %352 = vmatpush1.msra.mxu0 %v245
  %353 = vmatprep.subr.mxu0 0.0
  %354 = vmatpush1.msra.mxu0 0.0
  %355 = vmatprep.subr.mxu0 0.0
  %356 = vmatpush1.msra.mxu0 0.0
  %357 = vmatprep.subr.mxu0 0.0
  %358 = vmatpush1.msra.mxu0 0.0
  %359 = vmatprep.subr.mxu0 0.0
  %360 = vmatpush1.msra.mxu0 0.0
  %361 = vmatprep.subr.mxu0 0.0
  %362 = vmatpush1.msra.mxu0 0.0
  %363 = vmatprep.subr.mxu0 0.0
  %364 = vmatpush1.msra.mxu0 0.0
  %365 = vmatprep.subr.mxu0 0.0
  %366 = vmatpush1.msra.mxu0 0.0
  %367 = vmatprep.subr.mxu0 0.0
  %368 = vmatpush1.msra.mxu0 0.0
  %369 = vmatprep.subr.mxu0 0.0
  %370 = vmatpush1.msra.mxu0 0.0
  %371 = vmatprep.subr.mxu0 0.0
  %372 = vmatpush1.msra.mxu0 0.0
  %373 = vmatprep.subr.mxu0 0.0
  %374 = vmatpush1.msra.mxu0 0.0
  %375 = vmatprep.subr.mxu0 0.0
  %376 = vmatpush1.msra.mxu0 0.0
  %377 = vmatprep.subr.mxu0 0.0
  %378 = vmatpush1.msra.mxu0 0.0
  %379 = vmatprep.subr.mxu0 0.0
  %380 = vmatpush1.msra.mxu0 0.0
  %381 = vmatprep.subr.mxu0 0.0
  %382 = vmatpush1.msra.mxu0 0.0
  %383 = vmatprep.subr.mxu0 0.0
  %384 = vmatpush1.msra.mxu0 0.0
  %385 = vmatprep.mubr.f32.mxu0 0.0
  %386 = vmatmul.mubr.f32.gmra.mrb[0].mxu0 %v197
  %v387 = vpop.f32.mrb[0].mxu0
  %v388 = vadd.f32 %v318, %v387
  %v389 = vpop.f32.mrb[0].mxu0
  %390 = vdwg.mxu0
  %v391 = vmax.f32 %v388, 0.0
  %v392 = vld [vmem:[%s3] sm:$0xff]
  %v393 = vld [vmem:[%s3 + $0x8] sm:$0xff]
  %v394 = vld [vmem:[%s3 + $0x10] sm:$0xff]
  %v395 = vld [vmem:[%s3 + $0x18] sm:$0xff]
  %v396 = vld [vmem:[%s3 + $0x20] sm:$0xff]
  %v397 = vld [vmem:[%s3 + $0x28] sm:$0xff]
  %v398 = vld [vmem:[%s3 + $0x30] sm:$0xff]
  %v399 = vld [vmem:[%s3 + $0x38] sm:$0xff]
  %v400 = vld [vmem:[%s3 + $0x40] sm:$0xff]
  %v401 = vld [vmem:[%s3 + $0x48] sm:$0xff]
  %v402 = vld [vmem:[%s3 + $0x50] sm:$0xff]
  %v403 = vld [vmem:[%s3 + $0x58] sm:$0xff]
  %v404 = vld [vmem:[%s4 + $0x2] sm:$0x1]
  %v405 = vlaneseq
  %v406 = vshrl.u32 %v405, 7
  %v407 = vsub.s32 0, %v406
  %v408 = vrot.slane %v404, %v407
  %vm409 = vcmask 785408
  %v411 = vsel %vm409, %v391, 0
  %413 = vmatprep.subr.mxu0 0.0
  %414 = vmatpush1.msra.mxu0 %v392
  %415 = vmatprep.subr.mxu0 0.0
  %416 = vmatpush1.msra.mxu0 %v393
  %417 = vmatprep.subr.mxu0 0.0
  %418 = vmatpush1.msra.mxu0 %v394
  %419 = vmatprep.subr.mxu0 0.0
  %420 = vmatpush1.msra.mxu0 %v395
  %421 = vmatprep.subr.mxu0 0.0
  %422 = vmatpush1.msra.mxu0 %v396
  %423 = vmatprep.subr.mxu0 0.0
  %424 = vmatpush1.msra.mxu0 %v397
  %425 = vmatprep.subr.mxu0 0.0
  %426 = vmatpush1.msra.mxu0 %v398
  %427 = vmatprep.subr.mxu0 0.0
  %428 = vmatpush1.msra.mxu0 %v399
  %429 = vmatprep.subr.mxu0 0.0
  %430 = vmatpush1.msra.mxu0 %v400
  %431 = vmatprep.subr.mxu0 0.0
  %432 = vmatpush1.msra.mxu0 %v401
  %433 = vmatprep.subr.mxu0 0.0
  %434 = vmatpush1.msra.mxu0 %v402
  %435 = vmatprep.subr.mxu0 0.0
  %436 = vmatpush1.msra.mxu0 %v403
  %437 = vmatprep.subr.mxu0 0.0
  %438 = vmatpush1.msra.mxu0 0.0
  %439 = vmatprep.subr.mxu0 0.0
  %440 = vmatpush1.msra.mxu0 0.0
  %441 = vmatprep.subr.mxu0 0.0
  %442 = vmatpush1.msra.mxu0 0.0
  %443 = vmatprep.subr.mxu0 0.0
  %444 = vmatpush1.msra.mxu0 0.0
  %445 = vmatprep.subr.mxu0 0.0
  %446 = vmatpush1.msra.mxu0 0.0
  %447 = vmatprep.subr.mxu0 0.0
  %448 = vmatpush1.msra.mxu0 0.0
  %449 = vmatprep.subr.mxu0 0.0
  %450 = vmatpush1.msra.mxu0 0.0
  %451 = vmatprep.subr.mxu0 0.0
  %452 = vmatpush1.msra.mxu0 0.0
  %453 = vmatprep.subr.mxu0 0.0
  %454 = vmatpush1.msra.mxu0 0.0
  %455 = vmatprep.subr.mxu0 0.0
  %456 = vmatpush1.msra.mxu0 0.0
  %457 = vmatprep.subr.mxu0 0.0
  %458 = vmatpush1.msra.mxu0 0.0
  %459 = vmatprep.subr.mxu0 0.0
  %460 = vmatpush1.msra.mxu0 0.0
  %461 = vmatprep.subr.mxu0 0.0
  %462 = vmatpush1.msra.mxu0 0.0
  %463 = vmatprep.subr.mxu0 0.0
  %464 = vmatpush1.msra.mxu0 0.0
  %465 = vmatprep.subr.mxu0 0.0
  %466 = vmatpush1.msra.mxu0 0.0
  %467 = vmatprep.subr.mxu0 0.0
  %468 = vmatpush1.msra.mxu0 0.0
  %469 = vmatprep.subr.mxu0 0.0
  %470 = vmatpush1.msra.mxu0 0.0
  %471 = vmatprep.subr.mxu0 0.0
  %472 = vmatpush1.msra.mxu0 0.0
  %473 = vmatprep.subr.mxu0 0.0
  %474 = vmatpush1.msra.mxu0 0.0
  %475 = vmatprep.subr.mxu0 0.0
  %476 = vmatpush1.msra.mxu0 0.0
  %477 = vmatprep.mubr.f32.mxu0 0.0
  %478 = vmatmul.mubr.f32.gmra.mrb[0].mxu0 %v411
  %v479 = vpop.f32.mrb[0].mxu0
  %v480 = vadd.f32 %v408, %v479
  %v481 = vpop.f32.mrb[0].mxu0
  %482 = vdwg.mxu0
  %vm483 = vcmask 261120
  %484 = vst.msk [vmem:[%s5] sm:$0xff] %vm483, %v480
  // Predicated region
  $region22: #{decoder_forward.1} parent=0 // pred_check
    _
  $region23: #{decoder_forward.1} parent=0 // pred_check_branch
    %486 = sbr.rel (0) target = $region25
  $region24: #{decoder_forward.1} parent=0 // pred_region
    _
  $region25: #{decoder_forward.1} parent=0 // pred_fallthru
    _
  // Predicated region
  $region26: #{decoder_forward.1} parent=0 // pred_check
    _
  $region27: #{decoder_forward.1} parent=0 // pred_check_branch
    %488 = sbr.rel (0) target = $region29
  $region28: #{decoder_forward.1} parent=0 // pred_region
    _
  $region29: #{decoder_forward.1} parent=0 // pred_fallthru
    _

</llo_original>
